<compile_context>
chip_gen: v7x
topology: tpu7x:2x2x1
jax: 0.10.0
libtpu: 0.0.40
codegen_flags: <defaults>
</compile_context>

<pallas_src>
import functools

import jax
import jax.numpy as jnp
from jax.experimental import pallas as pl
from jax.experimental.pallas import tpu as pltpu


def _make_filtered_topk_kernel(k: int):
    """k-smallest indices of x + where(filt == fv, z, shim) for one row tile."""

    def kernel(fv_ref, z_ref, shim_ref, x_ref, filt_ref, idx_ref):
        x = x_ref[...].astype(jnp.float32)      # in-kernel upcast: free VPU op, no extra HBM
        filt = filt_ref[...]                    # [TB, N] int/float (possibly narrow)
        fv = fv_ref[0]                          # scalar (SMEM)
        z = z_ref[0]                            # scalar float32 (SMEM)
        shim = shim_ref[0]                      # scalar float32 (SMEM)

        # Elementwise hot path (pure VPU): x + where(filterColumn == filterValue, z, shim)
        scores = x + jnp.where(filt == fv, z, shim)

        tb, n = scores.shape
        col_ids = jax.lax.broadcasted_iota(jnp.int32, (tb, n), 1)   # lane index per element
        out_cols = jax.lax.broadcasted_iota(jnp.int32, (tb, k), 1)  # output column index
        inf = jnp.array(jnp.inf, scores.dtype)  # sentinel: never ties with a finite score

        def select_one(j, carry):
            scores, result = carry
            # NOTE: jnp.argmin has no Mosaic lowering, so emulate it:
            #   one XLU min for the value, one XLU min for the smallest tied index
            # (identical tie-break to torch.topk's stable ascending order).
            min_val = jnp.min(scores, axis=-1, keepdims=True)             # [TB, 1]
            cand = jnp.where(scores == min_val, col_ids, jnp.int32(n))    # [TB, N]
            idx = jnp.min(cand, axis=-1, keepdims=True)                   # [TB, 1]
            result = jnp.where(out_cols == j, idx, result)                # write column j in-register
            scores = jnp.where(col_ids == idx, inf, scores)               # mask out selected position
            return scores, result

        result = jnp.zeros((tb, k), jnp.int32)
        # Full unroll for small static k; partial unroll for larger k keeps the
        # LLO scheduler's visibility without vreg live-range / trace blowup.
        unroll = True if k <= 8 else 4
        _, result = jax.lax.fori_loop(0, k, select_one, (scores, result), unroll=unroll)

        idx_ref[...] = result                   # single store of the [TB, k] block

    return kernel


def _round_up(v: int, m: int) -> int:
    return ((v + m - 1) // m) * m


def _vmem_capacity_bytes() -> int:
    """Generation-aware VMEM capacity; conservative fallback if query fails."""
    try:
        info = pltpu.get_tpu_info()
        cap = int(getattr(info, "vmem_capacity_bytes", 0) or 0)
        if cap > 0:
            return cap
    except Exception:
        pass
    return 64 * 1024 * 1024     # v7x per-TC physical VMEM (smallest of the three)


def _choose_row_tile(batch: int, n: int, per_elem_bytes: int, budget_bytes: int,
                     *, align: int = 32, min_grid_steps: int = 4) -> int:
    """Rows per grid step under a VMEM budget that includes in-kernel temporaries."""
    tb = max(1, budget_bytes // (per_elem_bytes * max(n, 1)))
    tb = max(align, (tb // align) * align)      # 32-row alignment covers f32/bf16/int8 packing
    # Cap the tile so the grid has >= min_grid_steps steps: restores BlockSpec
    # double-buffering (DMA/compute overlap) and gives both v7x TCs work.
    tb = min(tb, _round_up(pl.cdiv(batch, min_grid_steps), align))
    if tb >= batch:
        return batch                            # one block; block dim == full dim is always legal
    return tb


@functools.partial(jax.jit, static_argnames=("k",))
def filtered_topk(x, filter_column, filter_value, z, shim, *, k: int):
    """x: [B, N] float, filter_column: [B, N] int/float, filter_value/z/shim scalars, k static."""
    x = jnp.asarray(x)                          # keep native dtype (bf16 stays bf16 in HBM)
    filter_column = jnp.asarray(filter_column)
    B, N = x.shape
    if k > N:
        raise ValueError(f"k={k} exceeds number of columns N={N}")

    fc_dtype = filter_column.dtype
    if jnp.issubdtype(fc_dtype, jnp.floating):
        filt = filter_column if fc_dtype.itemsize <= 4 else filter_column.astype(jnp.float32)
        fv = jnp.asarray(filter_value, jnp.float32).reshape((1,))
    elif jnp.issubdtype(fc_dtype, jnp.bool_):
        filt = filter_column.astype(jnp.int8)
        fv = jnp.asarray(filter_value, jnp.int32).reshape((1,))
    else:
        # Narrow wide ints to int32; keep int8/int16 as-is to cut HBM traffic.
        filt = (filter_column if fc_dtype.name in ("int8", "int16", "int32")
                else filter_column.astype(jnp.int32))
        fv = jnp.asarray(filter_value, jnp.int32).reshape((1,))
    zv = jnp.asarray(z, jnp.float32).reshape((1,))
    sv = jnp.asarray(shim, jnp.float32).reshape((1,))

    # Generation-aware VMEM budgeting.
    vmem_cap = _vmem_capacity_bytes()
    vmem_limit = max(32 * 1024 * 1024, min((vmem_cap * 3) // 4, 96 * 1024 * 1024))
    # Bytes per (row, col): double-buffered x + filter, plus in-kernel f32
    # scores and two i32 temporaries (col_ids, cand).
    per_elem = 2 * (x.dtype.itemsize + filt.dtype.itemsize) + 12
    budget = (vmem_limit * 2) // 3              # headroom for [TB,k] result/output buffers etc.

    tb = _choose_row_tile(B, N, per_elem, budget)
    grid = (pl.cdiv(B, tb),)

    return pl.pallas_call(
        _make_filtered_topk_kernel(k),
        out_shape=jax.ShapeDtypeStruct((B, k), jnp.int32),
        grid=grid,
        in_specs=[
            pl.BlockSpec(memory_space=pltpu.MemorySpace.SMEM),    # filterValue (scalar)
            pl.BlockSpec(memory_space=pltpu.MemorySpace.SMEM),    # z           (scalar)
            pl.BlockSpec(memory_space=pltpu.MemorySpace.SMEM),    # shim        (scalar)
            pl.BlockSpec((tb, N), lambda i: (i, 0)),              # x       [TB, N] native dtype
            pl.BlockSpec((tb, N), lambda i: (i, 0)),              # filter  [TB, N] narrow dtype
        ],
        out_specs=pl.BlockSpec((tb, k), lambda i: (i, 0)),        # indices [TB, k]
        compiler_params=pltpu.CompilerParams(
            # Rows are independent -> megacore-shardable grid axis (v7x); no-op on v5e/v6e.
            dimension_semantics=("parallel",),
            vmem_limit_bytes=vmem_limit,
        ),
    )(fv, zv, sv, x, filt)


if __name__ == "__main__":
    key = jax.random.PRNGKey(0)
    kx, kf, kx2, kf2 = jax.random.split(key, 4)

    # Test 1: float32 x + int32 filter, small shapes (single-block path).
    B, N, K = 8, 128, 4
    x = jax.random.normal(kx, (B, N), dtype=jnp.float32)
    filter_column = jax.random.randint(kf, (B, N), minval=0, maxval=3, dtype=jnp.int32)
    filter_value = 1            # keep entries whose filterColumn == 1
    z = 0.0                     # additive offset for kept entries
    shim = 1e6                  # large shim pushes filtered-out entries past the bottom-k

    out = filtered_topk(x, filter_column, filter_value, z, shim, k=K)
    out = jax.block_until_ready(out)

    adj = jnp.where(filter_column == filter_value, jnp.float32(z), jnp.float32(shim))
    ref = jnp.argsort(x + adj, axis=-1, stable=True)[:, :K].astype(jnp.int32)
    assert jnp.array_equal(out, ref), (out, ref)

    # Test 2: bf16 x + int8 filter (narrow-HBM path), multi-step grid.
    B2, N2, K2 = 64, 256, 6
    x2 = jax.random.normal(kx2, (B2, N2), dtype=jnp.bfloat16)
    filter_column2 = jax.random.randint(kf2, (B2, N2), 0, 3, dtype=jnp.int32).astype(jnp.int8)
    out2 = filtered_topk(x2, filter_column2, 2, 0.0, 1e6, k=K2)
    out2 = jax.block_until_ready(out2)

    adj2 = jnp.where(filter_column2 == 2, jnp.float32(0.0), jnp.float32(1e6))
    ref2 = jnp.argsort(x2.astype(jnp.float32) + adj2, axis=-1, stable=True)[:, :K2].astype(jnp.int32)
    assert jnp.array_equal(out2, ref2), (out2, ref2)

    print("KERNEL_OK")
</pallas_src>

<mosaic_0001>
module attributes {stable_mosaic.version = 11 : i64} {
  func.func @kernel(%arg0: i32, %arg1: memref<1xi32, #tpu.memory_space<smem>>, %arg2: memref<1xf32, #tpu.memory_space<smem>>, %arg3: memref<1xf32, #tpu.memory_space<smem>>, %arg4: memref<8x128xf32, #tpu.memory_space<vmem>>, %arg5: memref<8x128xi32, #tpu.memory_space<vmem>>, %arg6: memref<8x4xi32, #tpu.memory_space<vmem>>) attributes {dimension_semantics = [#tpu.dimension_semantics<parallel>], iteration_bounds = array<i64: 1>, scalar_prefetch = 0 : i64, scratch_operands = 0 : i64, tpu.core_type = #tpu.core_type<tc>, window_params = [{transform_indices = @transform_0, window_bounds = array<i64: 1>}, {transform_indices = @transform_1, window_bounds = array<i64: 1>}, {transform_indices = @transform_2, window_bounds = array<i64: 1>}, {transform_indices = @transform_3, window_bounds = array<i64: 8, 128>}, {transform_indices = @transform_4, window_bounds = array<i64: 8, 128>}, {transform_indices = @transform_5, window_bounds = array<i64: 8, 4>}]} {
    %c0 = arith.constant 0 : index
    %c0_0 = arith.constant 0 : index
    %0 = vector.load %arg4[%c0, %c0_0] : memref<8x128xf32, #tpu.memory_space<vmem>>, vector<8x128xf32>
    %c0_1 = arith.constant 0 : index
    %c0_2 = arith.constant 0 : index
    %1 = vector.load %arg5[%c0_1, %c0_2] : memref<8x128xi32, #tpu.memory_space<vmem>>, vector<8x128xi32>
    %c0_3 = arith.constant 0 : index
    %2 = memref.load %arg1[%c0_3] : memref<1xi32, #tpu.memory_space<smem>>
    %c0_4 = arith.constant 0 : index
    %3 = memref.load %arg2[%c0_4] : memref<1xf32, #tpu.memory_space<smem>>
    %c0_5 = arith.constant 0 : index
    %4 = memref.load %arg3[%c0_5] : memref<1xf32, #tpu.memory_space<smem>>
    %5 = vector.broadcast %2 : i32 to vector<8x128xi32>
    %6 = arith.cmpi eq, %1, %5 : vector<8x128xi32>
    %7 = vector.broadcast %3 : f32 to vector<8x128xf32>
    %8 = vector.broadcast %4 : f32 to vector<8x128xf32>
    %9 = arith.select %6, %7, %8 : vector<8x128xi1>, vector<8x128xf32>
    %10 = arith.addf %0, %9 : vector<8x128xf32>
    %11 = tpu.iota {dimensions = array<i32: 1>} : vector<8x128xi32>
    %12 = tpu.iota {dimensions = array<i32: 1>} : vector<8x4xi32>
    %c0_i32 = arith.constant 0 : i32
    %13 = vector.broadcast %c0_i32 : i32 to vector<8x4xi32>
    %cst = arith.constant 0x7F800000 : f32
    %c0_i32_6 = arith.constant 0 : i32
    %cst_7 = arith.constant dense<0x7F800000> : vector<8xf32>
    %14 = vector.multi_reduction <minimumf>, %10, %cst_7 [1] : vector<8x128xf32> to vector<8xf32>
    %15 = vector.shape_cast %14 : vector<8xf32> to vector<8x1xf32>
    %16 = vector.broadcast %15 : vector<8x1xf32> to vector<8x128xf32>
    %17 = arith.cmpf oeq, %10, %16 : vector<8x128xf32>
    %c128_i32 = arith.constant 128 : i32
    %18 = vector.broadcast %c128_i32 : i32 to vector<8x128xi32>
    %19 = arith.select %17, %11, %18 : vector<8x128xi1>, vector<8x128xi32>
    %cst_8 = arith.constant dense<2147483647> : vector<8xi32>
    %20 = vector.multi_reduction <minsi>, %19, %cst_8 [1] : vector<8x128xi32> to vector<8xi32>
    %21 = vector.shape_cast %20 : vector<8xi32> to vector<8x1xi32>
    %22 = vector.broadcast %c0_i32_6 : i32 to vector<8x4xi32>
    %23 = arith.cmpi eq, %12, %22 : vector<8x4xi32>
    %24 = vector.shape_cast %21 : vector<8x1xi32> to vector<8x1xi32>
    %25 = vector.broadcast %24 : vector<8x1xi32> to vector<8x4xi32>
    %26 = arith.select %23, %25, %13 : vector<8x4xi1>, vector<8x4xi32>
    %27 = vector.broadcast %21 : vector<8x1xi32> to vector<8x128xi32>
    %28 = arith.cmpi eq, %11, %27 : vector<8x128xi32>
    %29 = vector.broadcast %cst : f32 to vector<8x128xf32>
    %30 = arith.select %28, %29, %10 : vector<8x128xi1>, vector<8x128xf32>
    %c1_i32 = arith.constant 1 : i32
    %cst_9 = arith.constant dense<0x7F800000> : vector<8xf32>
    %31 = vector.multi_reduction <minimumf>, %30, %cst_9 [1] : vector<8x128xf32> to vector<8xf32>
    %32 = vector.shape_cast %31 : vector<8xf32> to vector<8x1xf32>
    %33 = vector.broadcast %32 : vector<8x1xf32> to vector<8x128xf32>
    %34 = arith.cmpf oeq, %30, %33 : vector<8x128xf32>
    %c128_i32_10 = arith.constant 128 : i32
    %35 = vector.broadcast %c128_i32_10 : i32 to vector<8x128xi32>
    %36 = arith.select %34, %11, %35 : vector<8x128xi1>, vector<8x128xi32>
    %cst_11 = arith.constant dense<2147483647> : vector<8xi32>
    %37 = vector.multi_reduction <minsi>, %36, %cst_11 [1] : vector<8x128xi32> to vector<8xi32>
    %38 = vector.shape_cast %37 : vector<8xi32> to vector<8x1xi32>
    %39 = vector.broadcast %c1_i32 : i32 to vector<8x4xi32>
    %40 = arith.cmpi eq, %12, %39 : vector<8x4xi32>
    %41 = vector.shape_cast %38 : vector<8x1xi32> to vector<8x1xi32>
    %42 = vector.broadcast %41 : vector<8x1xi32> to vector<8x4xi32>
    %43 = arith.select %40, %42, %26 : vector<8x4xi1>, vector<8x4xi32>
    %44 = vector.broadcast %38 : vector<8x1xi32> to vector<8x128xi32>
    %45 = arith.cmpi eq, %11, %44 : vector<8x128xi32>
    %46 = vector.broadcast %cst : f32 to vector<8x128xf32>
    %47 = arith.select %45, %46, %30 : vector<8x128xi1>, vector<8x128xf32>
    %c2_i32 = arith.constant 2 : i32
    %cst_12 = arith.constant dense<0x7F800000> : vector<8xf32>
    %48 = vector.multi_reduction <minimumf>, %47, %cst_12 [1] : vector<8x128xf32> to vector<8xf32>
    %49 = vector.shape_cast %48 : vector<8xf32> to vector<8x1xf32>
    %50 = vector.broadcast %49 : vector<8x1xf32> to vector<8x128xf32>
    %51 = arith.cmpf oeq, %47, %50 : vector<8x128xf32>
    %c128_i32_13 = arith.constant 128 : i32
    %52 = vector.broadcast %c128_i32_13 : i32 to vector<8x128xi32>
    %53 = arith.select %51, %11, %52 : vector<8x128xi1>, vector<8x128xi32>
    %cst_14 = arith.constant dense<2147483647> : vector<8xi32>
    %54 = vector.multi_reduction <minsi>, %53, %cst_14 [1] : vector<8x128xi32> to vector<8xi32>
    %55 = vector.shape_cast %54 : vector<8xi32> to vector<8x1xi32>
    %56 = vector.broadcast %c2_i32 : i32 to vector<8x4xi32>
    %57 = arith.cmpi eq, %12, %56 : vector<8x4xi32>
    %58 = vector.shape_cast %55 : vector<8x1xi32> to vector<8x1xi32>
    %59 = vector.broadcast %58 : vector<8x1xi32> to vector<8x4xi32>
    %60 = arith.select %57, %59, %43 : vector<8x4xi1>, vector<8x4xi32>
    %61 = vector.broadcast %55 : vector<8x1xi32> to vector<8x128xi32>
    %62 = arith.cmpi eq, %11, %61 : vector<8x128xi32>
    %63 = vector.broadcast %cst : f32 to vector<8x128xf32>
    %64 = arith.select %62, %63, %47 : vector<8x128xi1>, vector<8x128xf32>
    %c3_i32 = arith.constant 3 : i32
    %cst_15 = arith.constant dense<0x7F800000> : vector<8xf32>
    %65 = vector.multi_reduction <minimumf>, %64, %cst_15 [1] : vector<8x128xf32> to vector<8xf32>
    %66 = vector.shape_cast %65 : vector<8xf32> to vector<8x1xf32>
    %67 = vector.broadcast %66 : vector<8x1xf32> to vector<8x128xf32>
    %68 = arith.cmpf oeq, %64, %67 : vector<8x128xf32>
    %c128_i32_16 = arith.constant 128 : i32
    %69 = vector.broadcast %c128_i32_16 : i32 to vector<8x128xi32>
    %70 = arith.select %68, %11, %69 : vector<8x128xi1>, vector<8x128xi32>
    %cst_17 = arith.constant dense<2147483647> : vector<8xi32>
    %71 = vector.multi_reduction <minsi>, %70, %cst_17 [1] : vector<8x128xi32> to vector<8xi32>
    %72 = vector.shape_cast %71 : vector<8xi32> to vector<8x1xi32>
    %73 = vector.broadcast %c3_i32 : i32 to vector<8x4xi32>
    %74 = arith.cmpi eq, %12, %73 : vector<8x4xi32>
    %75 = vector.shape_cast %72 : vector<8x1xi32> to vector<8x1xi32>
    %76 = vector.broadcast %75 : vector<8x1xi32> to vector<8x4xi32>
    %77 = arith.select %74, %76, %60 : vector<8x4xi1>, vector<8x4xi32>
    %78 = vector.broadcast %72 : vector<8x1xi32> to vector<8x128xi32>
    %79 = arith.cmpi eq, %11, %78 : vector<8x128xi32>
    %80 = vector.broadcast %cst : f32 to vector<8x128xf32>
    %81 = arith.select %79, %80, %64 : vector<8x128xi1>, vector<8x128xf32>
    %c4_i32 = arith.constant 4 : i32
    %c0_18 = arith.constant 0 : index
    %c0_19 = arith.constant 0 : index
    %82 = vector.load %arg6[%c0_18, %c0_19] : memref<8x4xi32, #tpu.memory_space<vmem>>, vector<8x4xi32>
    tpu.vector_store %arg6[%c0_18, %c0_19], %77 {strides = array<i32>} : memref<8x4xi32, #tpu.memory_space<vmem>>, vector<8x4xi32>,
    return
  }
  func.func @transform_0(%arg0: i32) -> i32 {
    %c0_i32 = arith.constant 0 : i32
    %c0_i32_0 = arith.constant 0 : i32
    return %c0_i32 : i32
  }
  func.func @transform_1(%arg0: i32) -> i32 {
    %c0_i32 = arith.constant 0 : i32
    %c0_i32_0 = arith.constant 0 : i32
    return %c0_i32 : i32
  }
  func.func @transform_2(%arg0: i32) -> i32 {
    %c0_i32 = arith.constant 0 : i32
    %c0_i32_0 = arith.constant 0 : i32
    return %c0_i32 : i32
  }
  func.func @transform_3(%arg0: i32) -> (i32, i32) {
    %c0_i32 = arith.constant 0 : i32
    %c0_i32_0 = arith.constant 0 : i32
    return %arg0, %c0_i32 : i32, i32
  }
  func.func @transform_4(%arg0: i32) -> (i32, i32) {
    %c0_i32 = arith.constant 0 : i32
    %c0_i32_0 = arith.constant 0 : i32
    return %arg0, %c0_i32 : i32, i32
  }
  func.func @transform_5(%arg0: i32) -> (i32, i32) {
    %c0_i32 = arith.constant 0 : i32
    %c0_i32_0 = arith.constant 0 : i32
    return %arg0, %c0_i32 : i32, i32
  }
}

</mosaic_0001>

<llo_original>
// kernel: filtered_topk.1
$region0: #{filtered_topk.1}
  #allocation0 [shape = 'u32[]', space=smem, size = 0x4, offset = 0x4, fixed_abs, tag = 'smem constant byte address 0x4 - core index']
  #allocation1 [shape = 'u32[144,128]{1,0:T(1,128)}', space=vmem, size = 0x12000, scoped, tag = 'internal scratch']
  #allocation2 [shape = 's32[1]{0:T(128)S(6)}', space=smem, size = 0x200, scoped, tag = 'scoped memory for filtered_topk.1']
  #allocation3 [shape = 'f32[1]{0:T(128)S(6)}', space=smem, size = 0x200, scoped, tag = 'scoped memory for filtered_topk.1']
  #allocation4 [shape = 'f32[1]{0:T(128)S(6)}', space=smem, size = 0x200, scoped, tag = 'scoped memory for filtered_topk.1']
  %s0 = inlined_call_operand.<no memory space> [shape: s32[1], index: 0, kind: input, shape index: {}]
  %s1 = inlined_call_operand.<no memory space> [shape: f32[1], index: 1, kind: input, shape index: {}]
  %s2 = inlined_call_operand.<no memory space> [shape: f32[1], index: 2, kind: input, shape index: {}]
  %s3 = inlined_call_operand.vmem [shape: f32[8,128], index: 3, kind: input, shape index: {}]
  %s4 = inlined_call_operand.vmem [shape: s32[8,128], index: 4, kind: input, shape index: {}]
  %s5 = inlined_call_operand.vmem [shape: s32[8,4], index: 5, kind: output, shape index: {}]
  %s6 = sld [smem:[#allocation0]]
  $region30: #{filtered_topk.1} parent=0
    _
  %s8 = ssub.s32 1, %s6
  %s9 = scalar_select 0, %s8, %s6
  %10 = sst [smem:[#allocation2]] %s0
  %11 = sst [smem:[#allocation3]] %s1
  %12 = sst [smem:[#allocation4]] %s2
  // Predicated region
  $region2: #{filtered_topk.1} parent=0 // pred_check
    _
  $region3: #{filtered_topk.1} parent=0 // pred_check_branch
    %14 = sbr.rel (0) target = $region5
  $region4: #{filtered_topk.1} parent=0 // pred_region
    _
  $region5: #{filtered_topk.1} parent=0 // pred_fallthru
    _
  // Predicated region
  $region6: #{filtered_topk.1} parent=0 // pred_check
    _
  $region7: #{filtered_topk.1} parent=0 // pred_check_branch
    %16 = sbr.rel (0) target = $region9
  $region8: #{filtered_topk.1} parent=0 // pred_region
    _
  $region9: #{filtered_topk.1} parent=0 // pred_fallthru
    _
  // Predicated region
  $region10: #{filtered_topk.1} parent=0 // pred_check
    _
  $region11: #{filtered_topk.1} parent=0 // pred_check_branch
    %18 = sbr.rel (0) target = $region13
  $region12: #{filtered_topk.1} parent=0 // pred_region
    _
  $region13: #{filtered_topk.1} parent=0 // pred_fallthru
    _
  // Predicated region
  $region14: #{filtered_topk.1} parent=0 // pred_check
    _
  $region15: #{filtered_topk.1} parent=0 // pred_check_branch
    %20 = sbr.rel (0) target = $region17
  $region16: #{filtered_topk.1} parent=0 // pred_region
    _
  $region17: #{filtered_topk.1} parent=0 // pred_fallthru
    _
  // Predicated region
  $region18: #{filtered_topk.1} parent=0 // pred_check
    _
  $region19: #{filtered_topk.1} parent=0 // pred_check_branch
    %22 = sbr.rel (0) target = $region21
  $region20: #{filtered_topk.1} parent=0 // pred_region
    _
  $region21: #{filtered_topk.1} parent=0 // pred_fallthru
    _
  %v23 = vld [vmem:[%s3] sm:$0xff]
  %v24 = vld [vmem:[%s4] sm:$0xff]
  %s25 = sld [smem:[#allocation2]]
  %s26 = sld [smem:[#allocation3]]
  %s27 = sld [smem:[#allocation4]]
  %v28 = vstv %s25
  %vm29 = vcmp.eq.s32.totalorder %v24, %v28
  %v30 = vstv %s26
  %v31 = vstv %s27
  %v32 = vsel %vm29, %v30, %v31
  %v33 = vadd.f32 %v23, %v32
  %v34 = vlaneseq
  %v35 = vand.u32 %v34, 127
  %36 = vmin.xlane.f32.xlu0 %v33
  %v37 = vpop.xlane.xlu0 %36
  %vm38 = vcmp.eq.f32.partialorder %v33, %v37
  %v39 = vsel %vm38, %v35, 128
  %v40 = vand.u32 %v39, 65535
  %v41 = vshra.s32 %v39, 16
  %v42 = vcvt.s32.f32 %v40
  %v43 = vcvt.s32.f32 %v41
  %44 = vmin.xlane.f32.xlu0 %v43
  %v45 = vpop.xlane.xlu0 %44
  %vm46 = vcmp.eq.f32.partialorder %v43, %v45
  %v47 = vsel %vm46, %v42, inf
  %48 = vmin.xlane.f32.xlu0 %v47
  %v49 = vpop.xlane.xlu0 %48
  %v50 = vcvt.f32.s32 %v49
  %v51 = vcvt.f32.s32 %v45
  %v52 = vshll.u32 %v51, 16
  %v53 = vadd.s32 %v52, %v50
  %vm54 = vcmp.eq.s32.totalorder %v35, 0
  %v55 = vsel %vm54, %v53, 0
  %vm56 = vcmp.eq.s32.totalorder %v35, %v53
  %v57 = vsel %vm56, inf, %v33
  %58 = vmin.xlane.f32.xlu0 %v57
  %v59 = vpop.xlane.xlu0 %58
  %vm60 = vcmp.eq.f32.partialorder %v57, %v59
  %v61 = vsel %vm60, %v35, 128
  %v62 = vand.u32 %v61, 65535
  %v63 = vshra.s32 %v61, 16
  %v64 = vcvt.s32.f32 %v62
  %v65 = vcvt.s32.f32 %v63
  %66 = vmin.xlane.f32.xlu0 %v65
  %v67 = vpop.xlane.xlu0 %66
  %vm68 = vcmp.eq.f32.partialorder %v65, %v67
  %v69 = vsel %vm68, %v64, inf
  %70 = vmin.xlane.f32.xlu0 %v69
  %v71 = vpop.xlane.xlu0 %70
  %v72 = vcvt.f32.s32 %v71
  %v73 = vcvt.f32.s32 %v67
  %v74 = vshll.u32 %v73, 16
  %v75 = vadd.s32 %v74, %v72
  %vm76 = vcmp.eq.s32.totalorder %v35, 1
  %v77 = vsel %vm76, %v75, %v55
  %vm78 = vcmp.eq.s32.totalorder %v35, %v75
  %v79 = vsel %vm78, inf, %v57
  %80 = vmin.xlane.f32.xlu0 %v79
  %v81 = vpop.xlane.xlu0 %80
  %vm82 = vcmp.eq.f32.partialorder %v79, %v81
  %v83 = vsel %vm82, %v35, 128
  %v84 = vand.u32 %v83, 65535
  %v85 = vshra.s32 %v83, 16
  %v86 = vcvt.s32.f32 %v84
  %v87 = vcvt.s32.f32 %v85
  %88 = vmin.xlane.f32.xlu0 %v87
  %v89 = vpop.xlane.xlu0 %88
  %vm90 = vcmp.eq.f32.partialorder %v87, %v89
  %v91 = vsel %vm90, %v86, inf
  %92 = vmin.xlane.f32.xlu0 %v91
  %v93 = vpop.xlane.xlu0 %92
  %v94 = vcvt.f32.s32 %v93
  %v95 = vcvt.f32.s32 %v89
  %v96 = vshll.u32 %v95, 16
  %v97 = vadd.s32 %v96, %v94
  %vm98 = vcmp.eq.s32.totalorder %v35, 2
  %v99 = vsel %vm98, %v97, %v77
  %vm100 = vcmp.eq.s32.totalorder %v35, %v97
  %v101 = vsel %vm100, inf, %v79
  %102 = vmin.xlane.f32.xlu0 %v101
  %v103 = vpop.xlane.xlu0 %102
  %vm104 = vcmp.eq.f32.partialorder %v101, %v103
  %v105 = vsel %vm104, %v35, 128
  %v106 = vand.u32 %v105, 65535
  %v107 = vshra.s32 %v105, 16
  %v108 = vcvt.s32.f32 %v106
  %v109 = vcvt.s32.f32 %v107
  %110 = vmin.xlane.f32.xlu0 %v109
  %v111 = vpop.xlane.xlu0 %110
  %vm112 = vcmp.eq.f32.partialorder %v109, %v111
  %v113 = vsel %vm112, %v108, inf
  %114 = vmin.xlane.f32.xlu0 %v113
  %v115 = vpop.xlane.xlu0 %114
  %v116 = vcvt.f32.s32 %v115
  %v117 = vcvt.f32.s32 %v111
  %v118 = vshll.u32 %v117, 16
  %v119 = vadd.s32 %v118, %v116
  %vm120 = vcmp.eq.s32.totalorder %v35, 3
  %v121 = vsel %vm120, %v119, %v99
  %vm122 = vcmask 31744
  %123 = vst.msk [vmem:[%s5] sm:$0xff] %vm122, %v121
  // Predicated region
  $region22: #{filtered_topk.1} parent=0 // pred_check
    _
  $region23: #{filtered_topk.1} parent=0 // pred_check_branch
    %125 = sbr.rel (0) target = $region25
  $region24: #{filtered_topk.1} parent=0 // pred_region
    _
  $region25: #{filtered_topk.1} parent=0 // pred_fallthru
    _
  // Predicated region
  $region26: #{filtered_topk.1} parent=0 // pred_check
    _
  $region27: #{filtered_topk.1} parent=0 // pred_check_branch
    %127 = sbr.rel (0) target = $region29
  $region28: #{filtered_topk.1} parent=0 // pred_region
    _
  $region29: #{filtered_topk.1} parent=0 // pred_fallthru
    _

</llo_original>
